<compile_context>
chip_gen: v7x
topology: tpu7x:2x2x1
jax: 0.10.0
libtpu: 0.0.40
codegen_flags: <defaults>
</compile_context>

<pallas_src>
import functools
import math
from typing import Any, NamedTuple

import jax
import jax.numpy as jnp
from jax import lax
from jax.experimental import pallas as pl
from jax.experimental.pallas import tpu as pltpu

_SQRT2 = math.sqrt(2.0)


# ----------------------------------------------------------------------------
# Planning helpers
# ----------------------------------------------------------------------------
def _round_up(x, m):
    return (x + m - 1) // m * m


def _tpu_generation():
    try:
        kind = jax.devices()[0].device_kind.lower()
    except Exception:
        return 6
    for g in (7, 6, 5, 4):
        if f"v{g}" in kind:
            return g
    return 6


def _pick_tile(dim, cap, step, max_pad_frac=0.12):
    """Largest multiple of `step` (<= cap, <= aligned dim) whose induced
    padding of `dim` stays under `max_pad_frac`."""
    aligned = _round_up(dim, step)
    cap = max(step, min(cap, aligned))
    cap = cap // step * step
    t = cap
    while t >= step:
        pad = (-aligned) % t
        if pad / float(aligned + pad) <= max_pad_frac:
            return t
        t -= step
    return step


def _maybe_bump(tile, dim, unit, max_pad_frac=0.125):
    """Round `tile` up to a multiple of `unit` (native MXU width) if the
    extra padding of `dim` stays small."""
    if tile % unit == 0:
        return tile
    bumped = _round_up(tile, unit)
    padded = _round_up(dim, bumped)
    if (padded - dim) / float(padded) <= max_pad_frac:
        return bumped
    return tile


class EqualLinearPlan(NamedTuple):
    in_dim: int
    out_dim: int
    compute_dtype: Any            # np.dtype: streaming dtype for x / weight
    sublane: int                  # 8 for f32, 16 for bf16
    tn: int
    tk: int
    N: int                        # padded out_dim
    K: int                        # padded in_dim
    generation: int
    vmem_limit: int
    lr_mul: float = 1.0


def plan_equal_linear(in_dim, out_dim, *, compute_dtype=jnp.float32,
                      batch_hint=None, generation=None):
    """Choose generation-aware tiles / padded dims for a given layer shape."""
    gen = _tpu_generation() if generation is None else generation
    cdtype = jnp.dtype(compute_dtype)
    sublane = max(8, 32 // cdtype.itemsize)     # dtype-aware sublane step
    lane = 128
    mxu = 256 if gen >= 6 else 128              # v6e/v7x MXU is 2x256x256

    tn = _pick_tile(out_dim, 1024, lane)
    tk = _pick_tile(in_dim, 1024, lane)
    if gen >= 6:
        tn = _maybe_bump(tn, out_dim, mxu)
        tk = _maybe_bump(tk, in_dim, mxu)

    # v7x has 2 TensorCores: when the (usually tiny) batch collapses to a
    # single M tile, split N so dimension_semantics can shard across cores.
    n_al = _round_up(out_dim, lane)
    if gen >= 7 and (batch_hint is None or batch_hint <= 1024):
        half = (n_al // 2) // lane * lane
        if half >= 256:
            tn = min(tn, half)

    N = _round_up(n_al, tn)
    K = _round_up(_round_up(in_dim, lane), tk)
    vmem_limit = (40 if gen >= 7 else 64) * 1024 * 1024
    return EqualLinearPlan(in_dim=in_dim, out_dim=out_dim, compute_dtype=cdtype,
                           sublane=sublane, tn=tn, tk=tk, N=N, K=K,
                           generation=gen, vmem_limit=vmem_limit)


# ----------------------------------------------------------------------------
# Kernels
# ----------------------------------------------------------------------------
def _equal_linear_single_k_kernel(x_ref, wt_ref, b_ref, o_ref, *,
                                  scale, activation, precision):
    # K fits in a single tile: no scratch, fused epilogue straight to o_ref.
    out = jnp.dot(x_ref[...], wt_ref[...],
                  preferred_element_type=jnp.float32, precision=precision)
    out = out * scale + b_ref[...]              # bias already scaled by lr_mul
    if activation == "fused_lrelu":
        out = jnp.where(out >= 0.0, out, 0.2 * out) * _SQRT2
    o_ref[...] = out.astype(o_ref.dtype)


def _equal_linear_accum_kernel(x_ref, wt_ref, b_ref, o_ref, acc_ref, *,
                               scale, activation, precision):
    # 3-D grid (M, N, K) with K innermost; f32 VMEM accumulator.
    k = pl.program_id(2)
    part = jnp.dot(x_ref[...], wt_ref[...],
                   preferred_element_type=jnp.float32, precision=precision)

    @pl.when(k == 0)
    def _():
        acc_ref[...] = part                     # no zero-fill + add on step 0

    @pl.when(k != 0)
    def _():
        acc_ref[...] += part

    @pl.when(k == pl.num_programs(2) - 1)
    def _():
        out = acc_ref[...] * scale + b_ref[...]
        if activation == "fused_lrelu":
            out = jnp.where(out >= 0.0, out, 0.2 * out) * _SQRT2
        o_ref[...] = out.astype(o_ref.dtype)


# ----------------------------------------------------------------------------
# Parameter preparation (hoisted out of the per-call hot path)
# ----------------------------------------------------------------------------
def prepare_equal_linear(weight, bias=None, *, lr_mul=1.0, plan=None,
                         compute_dtype=None, batch_hint=None):
    """Pre-transpose/pad the weight to MXU-native [K, N] layout and pre-scale
    the bias by lr_mul.  Do this ONCE per layer and reuse across calls."""
    out_dim, in_dim = weight.shape
    if plan is None:
        cdtype = weight.dtype if compute_dtype is None else compute_dtype
        plan = plan_equal_linear(in_dim, out_dim, compute_dtype=cdtype,
                                 batch_hint=batch_hint)
    plan = plan._replace(lr_mul=float(lr_mul))
    K, N = plan.K, plan.N
    wt_p = jnp.pad(jnp.transpose(weight).astype(plan.compute_dtype),
                   ((0, K - in_dim), (0, N - out_dim)))
    if bias is None:
        b = jnp.zeros((out_dim,), jnp.float32)
    else:
        b = bias.astype(jnp.float32)
    b_p = jnp.pad(b * float(lr_mul), (0, N - out_dim)).reshape(1, N)
    return wt_p, b_p, plan


# ----------------------------------------------------------------------------
# Forward pass
# ----------------------------------------------------------------------------
def equal_linear_prepared(x, wt_p, b_p, plan, *, activation=None, precision=None):
    """EqualLinear forward with pre-prepared (transposed/padded) params.

    x: [B, in_dim];  wt_p: [K, N];  b_p: [1, N] (f32, already * lr_mul).
    `precision` can be lax.Precision.HIGHEST for strict f32 MXU parity.
    """
    B, in_dim = x.shape
    assert in_dim == plan.in_dim, (in_dim, plan.in_dim)
    out_dim, K, N, tk, tn = plan.out_dim, plan.K, plan.N, plan.tk, plan.tn
    cdtype, sublane = plan.compute_dtype, plan.sublane
    scale = (1.0 / math.sqrt(in_dim)) * plan.lr_mul
    out_dtype = x.dtype
    in_b = cdtype.itemsize
    out_b = jnp.dtype(out_dtype).itemsize

    # One M tile covering the whole (aligned) batch when it fits: the weight
    # slab is then streamed from HBM exactly once.
    tm = _pick_tile(B, 1024, sublane)

    def vmem_est(tm_):
        est = 2 * (tm_ * tk * in_b + tk * tn * in_b + tn * 4) + 2 * tm_ * tn * out_b
        if K // tk > 1:
            est += tm_ * tn * 4
        return est

    while vmem_est(tm) > int(0.8 * plan.vmem_limit) and tm > sublane:
        tm = max(sublane, _round_up(tm // 2, sublane))

    M = _round_up(_round_up(B, sublane), tm)
    x_p = jnp.pad(x.astype(cdtype), ((0, M - B), (0, K - in_dim)))

    grid_m, grid_n, grid_k = M // tm, N // tn, K // tk
    cost = pl.CostEstimate(
        flops=2 * M * K * N,
        transcendentals=0,
        bytes_accessed=(M * K * in_b            # x streamed once
                        + grid_m * K * N * in_b  # weight re-streamed per M tile
                        + N * 4                  # bias
                        + M * N * out_b),        # output
    )

    kern_kwargs = dict(scale=scale, activation=activation, precision=precision)
    if grid_k == 1:
        kernel = functools.partial(_equal_linear_single_k_kernel, **kern_kwargs)
        grid_spec = pltpu.PrefetchScalarGridSpec(
            num_scalar_prefetch=0,
            grid=(grid_m, grid_n),
            in_specs=[
                pl.BlockSpec((tm, tk), lambda i, j: (i, 0)),   # x tile
                pl.BlockSpec((tk, tn), lambda i, j: (0, j)),   # weight.T tile
                pl.BlockSpec((1, tn), lambda i, j: (0, j)),    # bias slice
            ],
            out_specs=pl.BlockSpec((tm, tn), lambda i, j: (i, j)),
        )
        semantics = ("parallel", "parallel")
    else:
        kernel = functools.partial(_equal_linear_accum_kernel, **kern_kwargs)
        grid_spec = pltpu.PrefetchScalarGridSpec(
            num_scalar_prefetch=0,
            grid=(grid_m, grid_n, grid_k),
            in_specs=[
                pl.BlockSpec((tm, tk), lambda i, j, k: (i, k)),   # x tile
                pl.BlockSpec((tk, tn), lambda i, j, k: (k, j)),   # weight.T tile
                pl.BlockSpec((1, tn), lambda i, j, k: (0, j)),    # bias slice
            ],
            out_specs=pl.BlockSpec((tm, tn), lambda i, j, k: (i, j)),
            scratch_shapes=[pltpu.VMEM((tm, tn), jnp.float32)],
        )
        semantics = ("parallel", "parallel", "arbitrary")

    out_padded = pl.pallas_call(
        kernel,
        out_shape=jax.ShapeDtypeStruct((M, N), out_dtype),
        grid_spec=grid_spec,
        compiler_params=pltpu.CompilerParams(
            dimension_semantics=semantics,
            vmem_limit_bytes=plan.vmem_limit),
        cost_estimate=cost,
    )(x_p, wt_p, b_p)

    return out_padded[:B, :out_dim]


def equal_linear(x, weight, bias=None, *, lr_mul=1.0, activation=None,
                 compute_dtype=None, precision=None):
    """One-shot convenience wrapper (plans + pads the weight per call).

    For repeated use (e.g. a StyleGAN2 mapping network evaluated every step),
    call prepare_equal_linear() once and reuse (wt_p, b_p, plan) with
    equal_linear_prepared() — ideally under a single jit — so the weight
    transpose/pad leaves the hot path.
    """
    wt_p, b_p, plan = prepare_equal_linear(
        weight, bias, lr_mul=lr_mul, compute_dtype=compute_dtype,
        batch_hint=x.shape[0])
    return equal_linear_prepared(x, wt_p, b_p, plan,
                                 activation=activation, precision=precision)


# ----------------------------------------------------------------------------
# Pure-JAX reference + tests
# ----------------------------------------------------------------------------
def _reference(x, weight, bias, *, lr_mul=1.0, activation=None):
    scale = (1.0 / math.sqrt(x.shape[1])) * lr_mul
    out = x @ (weight * scale).T + bias * lr_mul
    if activation == "fused_lrelu":
        out = jnp.where(out >= 0.0, out, 0.2 * out) * math.sqrt(2.0)
    return out


if __name__ == "__main__":
    key = jax.random.PRNGKey(0)

    # ---- case 1: small module-like shapes; prepared-params path under jit ---
    k_x, k_w, key = jax.random.split(key, 3)
    B, in_dim, out_dim = 8, 32, 16
    lr_mul = 0.01
    weight = jax.random.normal(k_w, (out_dim, in_dim), dtype=jnp.float32) / lr_mul
    bias = jnp.zeros((out_dim,), dtype=jnp.float32)          # bias_init = 0
    x = jax.random.normal(k_x, (B, in_dim), dtype=jnp.float32)

    wt_p, b_p, plan = prepare_equal_linear(weight, bias, lr_mul=lr_mul)
    run_plain = jax.jit(functools.partial(equal_linear_prepared,
                                          plan=plan, activation=None))
    run_act = jax.jit(functools.partial(equal_linear_prepared,
                                        plan=plan, activation="fused_lrelu"))
    out_plain = jax.block_until_ready(run_plain(x, wt_p, b_p))
    out_act = jax.block_until_ready(run_act(x, wt_p, b_p))

    ref_plain = _reference(x, weight, bias, lr_mul=lr_mul, activation=None)
    ref_act = _reference(x, weight, bias, lr_mul=lr_mul, activation="fused_lrelu")
    assert jnp.allclose(out_plain, ref_plain, atol=1e-4, rtol=1e-4), "plain mismatch (small)"
    assert jnp.allclose(out_act, ref_act, atol=1e-4, rtol=1e-4), "fused_lrelu mismatch (small)"

    # ---- case 2: larger, non-aligned shapes (padding / single-K fast path) --
    k_x2, k_w2, key = jax.random.split(key, 3)
    B2, in2, out2 = 520, 640, 384
    weight2 = jax.random.normal(k_w2, (out2, in2), dtype=jnp.float32)
    bias2 = jnp.full((out2,), 0.1, dtype=jnp.float32)
    x2 = jax.random.normal(k_x2, (B2, in2), dtype=jnp.float32)

    out2_act = jax.block_until_ready(
        equal_linear(x2, weight2, bias2, activation="fused_lrelu"))
    ref2_act = _reference(x2, weight2, bias2, activation="fused_lrelu")
    assert jnp.allclose(out2_act, ref2_act, atol=1e-3, rtol=1e-3), "fused_lrelu mismatch (tiled)"

    out2_plain = jax.block_until_ready(equal_linear(x2, weight2, bias2))
    ref2_plain = _reference(x2, weight2, bias2)
    assert jnp.allclose(out2_plain, ref2_plain, atol=1e-3, rtol=1e-3), "plain mismatch (tiled)"

    # ---- case 3: large K -> multi-K accumulation path ------------------------
    k_x3, k_w3, key = jax.random.split(key, 3)
    B3, in3, out3 = 32, 1536, 256
    weight3 = jax.random.normal(k_w3, (out3, in3), dtype=jnp.float32)
    bias3 = jnp.full((out3,), -0.05, dtype=jnp.float32)
    x3 = jax.random.normal(k_x3, (B3, in3), dtype=jnp.float32)

    out3_act = jax.block_until_ready(
        equal_linear(x3, weight3, bias3, activation="fused_lrelu"))
    ref3_act = _reference(x3, weight3, bias3, activation="fused_lrelu")
    assert jnp.allclose(out3_act, ref3_act, atol=2e-3, rtol=2e-3), "fused_lrelu mismatch (multi-K)"

    # ---- case 4: optional bf16 streaming path (numerics tradeoff) ------------
    out2_bf16 = jax.block_until_ready(
        equal_linear(x2, weight2, bias2, activation="fused_lrelu",
                     compute_dtype=jnp.bfloat16))
    assert jnp.allclose(out2_bf16, ref2_act, atol=0.1, rtol=0.1), "bf16 path mismatch"

    print("KERNEL_OK")
</pallas_src>

<mosaic_0001>
module attributes {stable_mosaic.version = 11 : i64} {
  func.func @_equal_linear_single_k_kernel(%arg0: i32, %arg1: i32, %arg2: memref<8x128xf32, #tpu.memory_space<vmem>>, %arg3: memref<128x128xf32, #tpu.memory_space<vmem>>, %arg4: memref<1x128xf32, #tpu.memory_space<vmem>>, %arg5: memref<8x128xf32, #tpu.memory_space<vmem>>) attributes {dimension_semantics = [#tpu.dimension_semantics<parallel>, #tpu.dimension_semantics<parallel>], iteration_bounds = array<i64: 1, 1>, scalar_prefetch = 0 : i64, scratch_operands = 0 : i64, tpu.core_type = #tpu.core_type<tc>, window_params = [{transform_indices = @transform_0, window_bounds = array<i64: 8, 128>}, {transform_indices = @transform_1, window_bounds = array<i64: 128, 128>}, {transform_indices = @transform_2, window_bounds = array<i64: 1, 128>}, {transform_indices = @transform_3, window_bounds = array<i64: 8, 128>}]} {
    %c0 = arith.constant 0 : index
    %c0_0 = arith.constant 0 : index
    %0 = vector.load %arg2[%c0, %c0_0] : memref<8x128xf32, #tpu.memory_space<vmem>>, vector<8x128xf32>
    %c0_1 = arith.constant 0 : index
    %c0_2 = arith.constant 0 : index
    %1 = vector.load %arg3[%c0_1, %c0_2] : memref<128x128xf32, #tpu.memory_space<vmem>>, vector<128x128xf32>
    %cst = arith.constant dense<0.000000e+00> : vector<8x128xf32>
    %2 = tpu.matmul %0, %1, %cst {dimension_numbers = #tpu.dot_dimension_numbers<[1], [0], [0], [1], [0, 0, 1, 1], [], []>} : vector<8x128xf32>, vector<128x128xf32>, vector<8x128xf32> -> vector<8x128xf32>
    %cst_3 = arith.constant 0.00176776689 : f32
    %3 = vector.broadcast %cst_3 : f32 to vector<8x128xf32>
    %4 = arith.mulf %2, %3 : vector<8x128xf32>
    %c0_4 = arith.constant 0 : index
    %c0_5 = arith.constant 0 : index
    %5 = vector.load %arg4[%c0_4, %c0_5] : memref<1x128xf32, #tpu.memory_space<vmem>>, vector<1x128xf32>
    %6 = vector.broadcast %5 : vector<1x128xf32> to vector<8x128xf32>
    %7 = arith.addf %4, %6 : vector<8x128xf32>
    %c0_6 = arith.constant 0 : index
    %c0_7 = arith.constant 0 : index
    %8 = vector.load %arg5[%c0_6, %c0_7] : memref<8x128xf32, #tpu.memory_space<vmem>>, vector<8x128xf32>
    tpu.vector_store %arg5[%c0_6, %c0_7], %7 {strides = array<i32>} : memref<8x128xf32, #tpu.memory_space<vmem>>, vector<8x128xf32>,
    return
  }
  func.func @transform_0(%arg0: i32, %arg1: i32) -> (i32, i32) {
    %c0_i32 = arith.constant 0 : i32
    %c0_i32_0 = arith.constant 0 : i32
    return %arg0, %c0_i32 : i32, i32
  }
  func.func @transform_1(%arg0: i32, %arg1: i32) -> (i32, i32) {
    %c0_i32 = arith.constant 0 : i32
    %c0_i32_0 = arith.constant 0 : i32
    return %c0_i32, %arg1 : i32, i32
  }
  func.func @transform_2(%arg0: i32, %arg1: i32) -> (i32, i32) {
    %c0_i32 = arith.constant 0 : i32
    %c0_i32_0 = arith.constant 0 : i32
    return %c0_i32, %arg1 : i32, i32
  }
  func.func @transform_3(%arg0: i32, %arg1: i32) -> (i32, i32) {
    %c0_i32 = arith.constant 0 : i32
    return %arg0, %arg1 : i32, i32
  }
}

</mosaic_0001>

<llo_original>
// kernel: equal_linear_prepared.1
$region0: #{equal_linear_prepared.1}
  #allocation0 [shape = 'u32[]', space=smem, size = 0x4, offset = 0x4, fixed_abs, tag = 'smem constant byte address 0x4 - core index']
  #allocation1 [shape = 'u32[144,128]{1,0:T(1,128)}', space=vmem, size = 0x12000, scoped, tag = 'internal scratch']
  %s0 = inlined_call_operand.hbm [shape: f32[8,128], index: 0, kind: input, shape index: {}]
  %s1 = inlined_call_operand.hbm [shape: f32[128,128], index: 1, kind: input, shape index: {}]
  %s2 = inlined_call_operand.hbm [shape: f32[1,128], index: 2, kind: input, shape index: {}]
  %s3 = inlined_call_operand.hbm [shape: f32[8,128], index: 3, kind: output, shape index: {}]
  %s4 = sld [smem:[#allocation0]]
  $region34: #{equal_linear_prepared.1} parent=0
    _
  %s6 = ssub.s32 1, %s4
  %s7 = scalar_select 0, %s6, %s4
  $region1: #{equal_linear_prepared.1} parent=0
    #allocation2 [shape = 'u8[4096]{0}', space=vmem, size = 0x1000, scoped, tag = 'input window, operand 0, single buffered']
    #allocation3 [shape = 's32[1]{0}', space=sflag, size = 0x4, scoped, tag = 'scoped memory for equal_linear_prepared.1']
    #allocation4 [shape = 's32[1]{0}', space=sflag, size = 0x4, scoped, tag = 'scoped memory for equal_linear_prepared.1']
    #allocation5 [shape = 'u8[65536]{0}', space=vmem, size = 0x10000, scoped, tag = 'input window, operand 1, single buffered']
    #allocation6 [shape = 's32[1]{0}', space=sflag, size = 0x4, scoped, tag = 'scoped memory for equal_linear_prepared.1']
    #allocation7 [shape = 'u8[512]{0}', space=vmem, size = 0x400, scoped, tag = 'input window, operand 2, single buffered']
    #allocation8 [shape = 'u8[4096]{0}', space=vmem, size = 0x1000, scoped, tag = 'output window, operand 0, single buffered']
    %8 = vsyncpa [#allocation3], 0
    %9 = vsyncpa [#allocation6], 0
    %10 = vsyncpa [#allocation4], 0
    // Predicated region
    $region2: #{equal_linear_prepared.1} parent=1 // pred_check
      _
    $region3: #{equal_linear_prepared.1} parent=1 // pred_check_branch
      %12 = sbr.rel (0) target = $region5
    $region4: #{equal_linear_prepared.1} parent=1 // pred_region
      %s14 = ssub.s32 128, 128
      %15 = vsyncadd [#allocation3], %s14
      %s17 = sshll.u32 [#allocation2], 4
      %s18 = int_to_ptr.vmem [resolvable:$true] %s17
      %20 = dma.hbm_to_vmem [thread:$0]  %s0, 128, %s18, [#allocation3]
    $region5: #{equal_linear_prepared.1} parent=1 // pred_fallthru
      _
    // Predicated region
    $region6: #{equal_linear_prepared.1} parent=1 // pred_check
      _
    $region7: #{equal_linear_prepared.1} parent=1 // pred_check_branch
      %22 = sbr.rel (0) target = $region9
    $region8: #{equal_linear_prepared.1} parent=1 // pred_region
      %s24 = ssub.s32 2048, 2048
      %25 = vsyncadd [#allocation6], %s24
      %s26 = sshll.u32 [#allocation5], 4
      %s27 = int_to_ptr.vmem [resolvable:$true] %s26
      %32 = dma.hbm_to_vmem [thread:$0]  %s1, 2048, %s27, [#allocation6], 128, 128, 8
    $region9: #{equal_linear_prepared.1} parent=1 // pred_fallthru
      _
    // Predicated region
    $region10: #{equal_linear_prepared.1} parent=1 // pred_check
      _
    $region11: #{equal_linear_prepared.1} parent=1 // pred_check_branch
      %34 = sbr.rel (0) target = $region13
    $region12: #{equal_linear_prepared.1} parent=1 // pred_region
      %s36 = ssub.s32 16, 16
      %37 = vsyncadd [#allocation6], %s36
      %s39 = sshll.u32 [#allocation7], 4
      %s40 = int_to_ptr.vmem [resolvable:$true] %s39
      %42 = dma.hbm_to_vmem [thread:$0]  %s2, 16, %s40, [#allocation6]
    $region13: #{equal_linear_prepared.1} parent=1 // pred_fallthru
      _
    // Predicated region
    $region14: #{equal_linear_prepared.1} parent=1 // pred_check
      _
    $region15: #{equal_linear_prepared.1} parent=1 // pred_check_branch
      %44 = sbr.rel (0) target = $region17
    $region16: #{equal_linear_prepared.1} parent=1 // pred_region
      %45 = dma.done [#allocation3], 128
    $region17: #{equal_linear_prepared.1} parent=1 // pred_fallthru
      _
    // Predicated region
    $region18: #{equal_linear_prepared.1} parent=1 // pred_check
      _
    $region19: #{equal_linear_prepared.1} parent=1 // pred_check_branch
      %47 = sbr.rel (0) target = $region21
    $region20: #{equal_linear_prepared.1} parent=1 // pred_region
      %48 = dma.done [#allocation6], 2048
    $region21: #{equal_linear_prepared.1} parent=1 // pred_fallthru
      _
    // Predicated region
    $region22: #{equal_linear_prepared.1} parent=1 // pred_check
      _
    $region23: #{equal_linear_prepared.1} parent=1 // pred_check_branch
      %50 = sbr.rel (0) target = $region25
    $region24: #{equal_linear_prepared.1} parent=1 // pred_region
      %51 = dma.done [#allocation6], 16
    $region25: #{equal_linear_prepared.1} parent=1 // pred_fallthru
      _
    %v52 = vld [vmem:[#allocation2] sm:$0xff]
    %v53 = vld [vmem:[#allocation5] sm:$0xff]
    %v54 = vld [vmem:[#allocation5 + $0x8] sm:$0xff]
    %v55 = vld [vmem:[#allocation5 + $0x10] sm:$0xff]
    %v56 = vld [vmem:[#allocation5 + $0x18] sm:$0xff]
    %v57 = vld [vmem:[#allocation5 + $0x20] sm:$0xff]
    %v58 = vld [vmem:[#allocation5 + $0x28] sm:$0xff]
    %v59 = vld [vmem:[#allocation5 + $0x30] sm:$0xff]
    %v60 = vld [vmem:[#allocation5 + $0x38] sm:$0xff]
    %v61 = vld [vmem:[#allocation5 + $0x40] sm:$0xff]
    %v62 = vld [vmem:[#allocation5 + $0x48] sm:$0xff]
    %v63 = vld [vmem:[#allocation5 + $0x50] sm:$0xff]
    %v64 = vld [vmem:[#allocation5 + $0x58] sm:$0xff]
    %v65 = vld [vmem:[#allocation5 + $0x60] sm:$0xff]
    %v66 = vld [vmem:[#allocation5 + $0x68] sm:$0xff]
    %v67 = vld [vmem:[#allocation5 + $0x70] sm:$0xff]
    %v68 = vld [vmem:[#allocation5 + $0x78] sm:$0xff]
    %69 = vmatprep.subr.mxu0 0.0
    %70 = vmatpush1.msra.mxu0 %v53
    %71 = vmatprep.subr.mxu0 0.0
    %72 = vmatpush1.msra.mxu0 %v54
    %73 = vmatprep.subr.mxu0 0.0
    %74 = vmatpush1.msra.mxu0 %v55
    %75 = vmatprep.subr.mxu0 0.0
    %76 = vmatpush1.msra.mxu0 %v56
    %77 = vmatprep.subr.mxu0 0.0
    %78 = vmatpush1.msra.mxu0 %v57
    %79 = vmatprep.subr.mxu0 0.0
    %80 = vmatpush1.msra.mxu0 %v58
    %81 = vmatprep.subr.mxu0 0.0
    %82 = vmatpush1.msra.mxu0 %v59
    %83 = vmatprep.subr.mxu0 0.0
    %84 = vmatpush1.msra.mxu0 %v60
    %85 = vmatprep.subr.mxu0 0.0
    %86 = vmatpush1.msra.mxu0 %v61
    %87 = vmatprep.subr.mxu0 0.0
    %88 = vmatpush1.msra.mxu0 %v62
    %89 = vmatprep.subr.mxu0 0.0
    %90 = vmatpush1.msra.mxu0 %v63
    %91 = vmatprep.subr.mxu0 0.0
    %92 = vmatpush1.msra.mxu0 %v64
    %93 = vmatprep.subr.mxu0 0.0
    %94 = vmatpush1.msra.mxu0 %v65
    %95 = vmatprep.subr.mxu0 0.0
    %96 = vmatpush1.msra.mxu0 %v66
    %97 = vmatprep.subr.mxu0 0.0
    %98 = vmatpush1.msra.mxu0 %v67
    %99 = vmatprep.subr.mxu0 0.0
    %100 = vmatpush1.msra.mxu0 %v68
    %101 = vmatprep.subr.mxu0 0.0
    %102 = vmatpush1.msra.mxu0 0.0
    %103 = vmatprep.subr.mxu0 0.0
    %104 = vmatpush1.msra.mxu0 0.0
    %105 = vmatprep.subr.mxu0 0.0
    %106 = vmatpush1.msra.mxu0 0.0
    %107 = vmatprep.subr.mxu0 0.0
    %108 = vmatpush1.msra.mxu0 0.0
    %109 = vmatprep.subr.mxu0 0.0
    %110 = vmatpush1.msra.mxu0 0.0
    %111 = vmatprep.subr.mxu0 0.0
    %112 = vmatpush1.msra.mxu0 0.0
    %113 = vmatprep.subr.mxu0 0.0
    %114 = vmatpush1.msra.mxu0 0.0
    %115 = vmatprep.subr.mxu0 0.0
    %116 = vmatpush1.msra.mxu0 0.0
    %117 = vmatprep.subr.mxu0 0.0
    %118 = vmatpush1.msra.mxu0 0.0
    %119 = vmatprep.subr.mxu0 0.0
    %120 = vmatpush1.msra.mxu0 0.0
    %121 = vmatprep.subr.mxu0 0.0
    %122 = vmatpush1.msra.mxu0 0.0
    %123 = vmatprep.subr.mxu0 0.0
    %124 = vmatpush1.msra.mxu0 0.0
    %125 = vmatprep.subr.mxu0 0.0
    %126 = vmatpush1.msra.mxu0 0.0
    %127 = vmatprep.subr.mxu0 0.0
    %128 = vmatpush1.msra.mxu0 0.0
    %129 = vmatprep.subr.mxu0 0.0
    %130 = vmatpush1.msra.mxu0 0.0
    %131 = vmatprep.subr.mxu0 0.0
    %132 = vmatpush1.msra.mxu0 0.0
    %133 = vmatprep.mubr.f32.mxu0 0.0
    %134 = vmatmul.mubr.f32.gmra.mrb[0].mxu0 %v52
    %v135 = vpop.f32.mrb[0].mxu0
    %v136 = vadd.f32 0.0, %v135
    %v137 = vpop.f32.mrb[0].mxu0
    %138 = vdwg.mxu0
    %v139 = vmul.f32 %v136, 0.0017677669
    %v140 = vld [vmem:[#allocation7] sm:$0x1]
    %v142 = vlaneseq
    %v143 = vshrl.u32 %v142, 7
    %v144 = vsub.s32 0, %v143
    %v145 = vrot.slane %v140, %v144
    %v147 = vadd.f32 %v139, %v145
    %148 = vst [vmem:[#allocation8] sm:$0xff] %v147
    // Predicated region
    $region26: #{equal_linear_prepared.1} parent=1 // pred_check
      _
    $region27: #{equal_linear_prepared.1} parent=1 // pred_check_branch
      %150 = sbr.rel (0) target = $region29
    $region28: #{equal_linear_prepared.1} parent=1 // pred_region
      %s152 = ssub.s32 128, 128
      %153 = vsyncadd [#allocation4], %s152
      %s155 = sshll.u32 [#allocation8], 4
      %s156 = int_to_ptr.vmem [resolvable:$true] %s155
      %158 = dma.vmem_to_hbm [thread:$0]  %s156, 128, %s3, [#allocation4]
    $region29: #{equal_linear_prepared.1} parent=1 // pred_fallthru
      _
    // Predicated region
    $region30: #{equal_linear_prepared.1} parent=1 // pred_check
      _
    $region31: #{equal_linear_prepared.1} parent=1 // pred_check_branch
      %160 = sbr.rel (0) target = $region33
    $region32: #{equal_linear_prepared.1} parent=1 // pred_region
      %161 = dma.done [#allocation4], 128
    $region33: #{equal_linear_prepared.1} parent=1 // pred_fallthru
      _
    %162 = vsyncpa [#allocation3], 1
    %163 = vsyncpa [#allocation6], 1
    %164 = vsyncpa [#allocation4], 1

</llo_original>
